<compile_context>
chip_gen: v7x
topology: tpu7x:2x2x1
jax: 0.10.0
libtpu: 0.0.40
codegen_flags: <defaults>
</compile_context>

<pallas_src>
import functools
import math

import jax
import jax.numpy as jnp
from jax import lax
from jax.experimental import pallas as pl
from jax.experimental.pallas import tpu as pltpu

EPSILON = 1e-8   # matches the module-level EPSILON in the PyTorch spec


def _round_up(x, m):
    return (x + m - 1) // m * m


# -----------------------------------------------------------------------------
# Kernel: one M-tile of the fused link.
#   y = x @ W_eff + b_eff              (single MXU GEMM, f32 accumulate)
#   lanes [0, z_size)        -> 'loc'   (identity)  + EPSILON
#   lanes [z_size, 2*z_size) -> 'scale' (softplus)  + EPSILON
# The output slab is lane-dense (width padded to a multiple of 128); padding
# lanes are garbage and sliced away in the wrapper.
# -----------------------------------------------------------------------------
def fused_link_kernel(x_ref, w_ref, b_ref, out_ref, *, z_size):
    x = x_ref[...]
    y = jnp.dot(x, w_ref[...], preferred_element_type=jnp.float32)
    y = y + b_ref[...]                                   # f32 bias add (v5e-safe)
    col = lax.broadcasted_iota(jnp.int32, y.shape, 1)
    # Full-vreg select: softplus runs on the EUP slot (free-ish), no sub-lane
    # slicing needed, store stays a full unmasked 128-lane vst.
    y = jnp.where(col < z_size, y, jax.nn.softplus(y)) + EPSILON
    out_ref[...] = y.astype(out_ref.dtype)


# -----------------------------------------------------------------------------
# Wrapper-side algebraic fold of the linear chain (done once, in f32).
# -----------------------------------------------------------------------------
def fold_link_params(params, n_pad):
    """linear1 -> linear2 -> [loc|scale] heads folded into one [in, n_pad] GEMM."""
    w1, b1, w2, b2, wloc, bloc, wsc, bsc = [p.astype(jnp.float32) for p in params]
    w_heads = jnp.concatenate([wloc, wsc], axis=1)           # [out, 2z]
    b_heads = jnp.concatenate([bloc, bsc], axis=1)           # [1, 2z]
    w12 = w1 @ w2                                            # [in, out]
    b12 = b1 @ w2 + b2                                       # [1, out]
    w_eff = w12 @ w_heads                                    # [in, 2z]
    b_eff = b12 @ w_heads + b_heads                          # [1, 2z]
    pad = n_pad - w_eff.shape[1]
    w_eff = jnp.pad(w_eff, ((0, 0), (0, pad)))               # lane-dense width
    b_eff = jnp.pad(b_eff, ((0, 0), (0, pad)))
    return w_eff, b_eff


def qkv_link_head_forward(x, params, *, tile_m=1024, use_bf16=False):
    """x: [..., input_size]. Returns {'loc','scale'}: [..., z_size] float32."""
    w1 = params[0]
    wloc = params[4]
    in_size = w1.shape[0]
    z_size = wloc.shape[1]
    n_out = 2 * z_size
    n_pad = max(128, _round_up(n_out, 128))   # lane-dense fused output width

    lead = x.shape[:-1]
    m = int(math.prod(lead)) if lead else 1

    w_eff, b_eff = fold_link_params(params, n_pad)

    compute_dtype = jnp.bfloat16 if use_bf16 else jnp.float32
    x2d = x.reshape(m, in_size).astype(compute_dtype)
    w_eff_c = w_eff.astype(compute_dtype)     # bias stays f32 (v5e epilogue path)

    # Row tile: multiple of 8 sublanes; capped so double-buffered x/out blocks
    # stay far below v5e's 16 MiB scoped-VMEM default and v7x's 64 MiB VMEM.
    tm = min(tile_m, _round_up(m, 8))
    m_pad = _round_up(m, tm)
    if m_pad != m:
        x2d = jnp.pad(x2d, ((0, m_pad - m), (0, 0)))
    grid = (m_pad // tm,)

    itemsize = jnp.dtype(compute_dtype).itemsize
    cost = pl.CostEstimate(
        flops=2 * m_pad * in_size * n_pad,
        transcendentals=m_pad * n_pad,
        bytes_accessed=(m_pad * in_size * itemsize       # x (streamed)
                        + in_size * n_pad * itemsize     # W_eff (resident)
                        + n_pad * 4                      # b_eff
                        + m_pad * n_pad * 4),            # fused output slab
    )

    out = pl.pallas_call(
        functools.partial(fused_link_kernel, z_size=z_size),
        out_shape=jax.ShapeDtypeStruct((m_pad, n_pad), jnp.float32),
        grid=grid,
        in_specs=[
            pl.BlockSpec((tm, in_size), lambda i: (i, 0)),     # x: tiled over M
            pl.BlockSpec((in_size, n_pad), lambda i: (0, 0)),  # W_eff: resident
            pl.BlockSpec((1, n_pad), lambda i: (0, 0)),        # b_eff: resident
        ],
        out_specs=pl.BlockSpec((tm, n_pad), lambda i: (i, 0)),
        compiler_params=pltpu.CompilerParams(
            dimension_semantics=("parallel",),   # v7x megacore splits M; no-op v5e/v6e
        ),
        cost_estimate=cost,
    )(x2d, w_eff_c, b_eff)

    loc = out[:m, :z_size].reshape(*lead, z_size)
    scale = out[:m, z_size:n_out].reshape(*lead, z_size)
    return {"loc": loc, "scale": scale}


# -----------------------------------------------------------------------------
# Parameter init (nn.Linear-style uniform ±1/sqrt(fan_in)); weights stored
# pre-transposed as [in, out], biases as [1, out].
# -----------------------------------------------------------------------------
def init_params(key, input_size, output_size, z_size):
    def linear(k, fan_in, fan_out):
        kw, kb = jax.random.split(k)
        bound = 1.0 / math.sqrt(fan_in)
        w = jax.random.uniform(kw, (fan_in, fan_out), jnp.float32, -bound, bound)
        b = jax.random.uniform(kb, (1, fan_out), jnp.float32, -bound, bound)
        return w, b

    k1, k2, k3, k4 = jax.random.split(key, 4)
    w1, b1 = linear(k1, input_size, output_size)      # link linear 1
    w2, b2 = linear(k2, output_size, output_size)     # link linear 2
    wloc, bloc = linear(k3, output_size, z_size)      # hidden_to_z_params['loc']
    wsc, bsc = linear(k4, output_size, z_size)        # hidden_to_z_params['scale']
    return (w1, b1, w2, b2, wloc, bloc, wsc, bsc)


def reference_forward(x, params):
    """Plain-JAX layer-by-layer reference (unfolded) of the same forward."""
    (w1, b1, w2, b2, wloc, bloc, wsc, bsc) = params
    h = x @ w1 + b1[0]
    h = h @ w2 + b2[0]
    return {
        "loc": (h @ wloc + bloc[0]) + EPSILON,
        "scale": jax.nn.softplus(h @ wsc + bsc[0]) + EPSILON,
    }


if __name__ == "__main__":
    # Small shapes consistent with the link's head stage.
    input_size = 32
    output_size = 32
    z_size = 16
    batch, seq = 2, 8

    key = jax.random.PRNGKey(0)
    kx, kp = jax.random.split(key)
    x = jax.random.normal(kx, (batch, seq, input_size), jnp.float32)
    params = init_params(kp, input_size, output_size, z_size)

    ref = reference_forward(x, params)

    # f32 path: only fp32 reassociation from the weight fold should differ.
    out = qkv_link_head_forward(x, params, use_bf16=False)
    jax.block_until_ready(out)
    assert out["loc"].shape == (batch, seq, z_size)
    assert out["scale"].shape == (batch, seq, z_size)
    assert jnp.allclose(out["loc"], ref["loc"], atol=1e-4, rtol=1e-4)
    assert jnp.allclose(out["scale"], ref["scale"], atol=1e-4, rtol=1e-4)

    # bf16 input/weight fast path (v6e/v7x); f32 accumulate + f32 epilogue.
    out_bf16 = qkv_link_head_forward(x, params, use_bf16=True)
    jax.block_until_ready(out_bf16)
    assert jnp.allclose(out_bf16["loc"], ref["loc"], atol=5e-2, rtol=5e-2)
    assert jnp.allclose(out_bf16["scale"], ref["scale"], atol=5e-2, rtol=5e-2)

    print("KERNEL_OK")
</pallas_src>

<mosaic_0001>
module attributes {stable_mosaic.version = 11 : i64} {
  func.func @fused_link_kernel(%arg0: i32, %arg1: memref<16x32xf32, #tpu.memory_space<vmem>>, %arg2: memref<32x128xf32, #tpu.memory_space<vmem>>, %arg3: memref<1x128xf32, #tpu.memory_space<vmem>>, %arg4: memref<16x128xf32, #tpu.memory_space<vmem>>) attributes {dimension_semantics = [#tpu.dimension_semantics<parallel>], iteration_bounds = array<i64: 1>, scalar_prefetch = 0 : i64, scratch_operands = 0 : i64, tpu.core_type = #tpu.core_type<tc>, window_params = [{transform_indices = @transform_0, window_bounds = array<i64: 16, 32>}, {pipeline_mode = #tpu.pipeline_mode<synchronous>, transform_indices = @transform_1, window_bounds = array<i64: 32, 128>}, {pipeline_mode = #tpu.pipeline_mode<synchronous>, transform_indices = @transform_2, window_bounds = array<i64: 1, 128>}, {transform_indices = @transform_3, window_bounds = array<i64: 16, 128>}]} {
    %c0 = arith.constant 0 : index
    %c0_0 = arith.constant 0 : index
    %0 = vector.load %arg1[%c0, %c0_0] : memref<16x32xf32, #tpu.memory_space<vmem>>, vector<16x32xf32>
    %c0_1 = arith.constant 0 : index
    %c0_2 = arith.constant 0 : index
    %1 = vector.load %arg2[%c0_1, %c0_2] : memref<32x128xf32, #tpu.memory_space<vmem>>, vector<32x128xf32>
    %cst = arith.constant dense<0.000000e+00> : vector<16x128xf32>
    %2 = tpu.matmul %0, %1, %cst {dimension_numbers = #tpu.dot_dimension_numbers<[1], [0], [0], [1], [0, 0, 1, 1], [], []>} : vector<16x32xf32>, vector<32x128xf32>, vector<16x128xf32> -> vector<16x128xf32>
    %c0_3 = arith.constant 0 : index
    %c0_4 = arith.constant 0 : index
    %3 = vector.load %arg3[%c0_3, %c0_4] : memref<1x128xf32, #tpu.memory_space<vmem>>, vector<1x128xf32>
    %4 = vector.broadcast %3 : vector<1x128xf32> to vector<16x128xf32>
    %5 = arith.addf %2, %4 : vector<16x128xf32>
    %6 = tpu.iota {dimensions = array<i32: 1>} : vector<16x128xi32>
    %c16_i32 = arith.constant 16 : i32
    %7 = vector.broadcast %c16_i32 : i32 to vector<16x128xi32>
    %8 = arith.cmpi slt, %6, %7 : vector<16x128xi32>
    %cst_5 = arith.constant 0.000000e+00 : f32
    %9 = vector.broadcast %cst_5 : f32 to vector<16x128xf32>
    %10 = arith.maximumf %5, %9 : vector<16x128xf32>
    %11 = vector.broadcast %cst_5 : f32 to vector<16x128xf32>
    %12 = arith.subf %5, %11 : vector<16x128xf32>
    %13 = arith.cmpf one, %12, %12 : vector<16x128xf32>
    %14 = vector.broadcast %cst_5 : f32 to vector<16x128xf32>
    %15 = arith.addf %5, %14 : vector<16x128xf32>
    %16 = math.absf %12 : vector<16x128xf32>
    %cst_6 = arith.constant 0.000000e+00 : f32
    %17 = vector.broadcast %cst_6 : f32 to vector<16x128xf32>
    %18 = arith.subf %17, %16 : vector<16x128xf32>
    %19 = math.exp %18 : vector<16x128xf32>
    %20 = math.log1p %19 : vector<16x128xf32>
    %21 = arith.addf %10, %20 : vector<16x128xf32>
    %22 = arith.select %13, %15, %21 : vector<16x128xi1>, vector<16x128xf32>
    %23 = arith.select %8, %5, %22 : vector<16x128xi1>, vector<16x128xf32>
    %cst_7 = arith.constant 9.99999993E-9 : f32
    %24 = vector.broadcast %cst_7 : f32 to vector<16x128xf32>
    %25 = arith.addf %23, %24 : vector<16x128xf32>
    %c0_8 = arith.constant 0 : index
    %c0_9 = arith.constant 0 : index
    %26 = vector.load %arg4[%c0_8, %c0_9] : memref<16x128xf32, #tpu.memory_space<vmem>>, vector<16x128xf32>
    tpu.vector_store %arg4[%c0_8, %c0_9], %25 {strides = array<i32>} : memref<16x128xf32, #tpu.memory_space<vmem>>, vector<16x128xf32>,
    return
  }
  func.func @transform_0(%arg0: i32) -> (i32, i32) {
    %c0_i32 = arith.constant 0 : i32
    %c0_i32_0 = arith.constant 0 : i32
    return %arg0, %c0_i32 : i32, i32
  }
  func.func @transform_1(%arg0: i32) -> (i32, i32) {
    %c0_i32 = arith.constant 0 : i32
    %c0_i32_0 = arith.constant 0 : i32
    %c0_i32_1 = arith.constant 0 : i32
    return %c0_i32, %c0_i32_0 : i32, i32
  }
  func.func @transform_2(%arg0: i32) -> (i32, i32) {
    %c0_i32 = arith.constant 0 : i32
    %c0_i32_0 = arith.constant 0 : i32
    %c0_i32_1 = arith.constant 0 : i32
    return %c0_i32, %c0_i32_0 : i32, i32
  }
  func.func @transform_3(%arg0: i32) -> (i32, i32) {
    %c0_i32 = arith.constant 0 : i32
    %c0_i32_0 = arith.constant 0 : i32
    return %arg0, %c0_i32 : i32, i32
  }
}

</mosaic_0001>

<llo_original>
// kernel: tpu_custom_call.1
$region0: #{tpu_custom_call.1}
  #allocation0 [shape = 'u32[]', space=smem, size = 0x4, offset = 0x4, fixed_abs, tag = 'smem constant byte address 0x4 - core index']
  #allocation1 [shape = 'u32[144,128]{1,0:T(1,128)}', space=vmem, size = 0x12000, scoped, tag = 'internal scratch']
  %s0 = inlined_call_operand.hbm [shape: f32[16,32], index: 0, kind: input, shape index: {}]
  %s1 = inlined_call_operand.hbm [shape: f32[32,128], index: 1, kind: input, shape index: {}]
  %s2 = inlined_call_operand.vmem [shape: f32[1,128], index: 2, kind: input, shape index: {}]
  %s3 = inlined_call_operand.hbm [shape: f32[16,128], index: 3, kind: output, shape index: {}]
  %s4 = sld [smem:[#allocation0]]
  $region30: #{tpu_custom_call.1} parent=0
    _
  %s6 = ssub.s32 1, %s4
  %s7 = scalar_select 0, %s6, %s4
  $region1: #{tpu_custom_call.1} parent=0
    #allocation2 [shape = 'u8[8192]{0}', space=vmem, size = 0x2000, scoped, tag = 'input window, operand 0, single buffered']
    #allocation3 [shape = 's32[1]{0}', space=sflag, size = 0x4, scoped, tag = 'scoped memory for tpu_custom_call.1']
    #allocation4 [shape = 's32[1]{0}', space=sflag, size = 0x4, scoped, tag = 'scoped memory for tpu_custom_call.1']
    #allocation5 [shape = 'u8[16384]{0}', space=vmem, size = 0x4000, scoped, tag = 'input window, operand 1, single buffered']
    #allocation6 [shape = 's32[1]{0}', space=sflag, size = 0x4, scoped, tag = 'scoped memory for tpu_custom_call.1']
    #allocation7 [shape = 'u8[8192]{0}', space=vmem, size = 0x2000, scoped, tag = 'output window, operand 0, single buffered']
    %8 = vsyncpa [#allocation3], 0
    %9 = vsyncpa [#allocation6], 0
    %10 = vsyncpa [#allocation4], 0
    // Predicated region
    $region2: #{tpu_custom_call.1} parent=1 // pred_check
      _
    $region3: #{tpu_custom_call.1} parent=1 // pred_check_branch
      %12 = sbr.rel (0) target = $region5
    $region4: #{tpu_custom_call.1} parent=1 // pred_region
      %s14 = ssub.s32 256, 256
      %15 = vsyncadd [#allocation3], %s14
      %s16 = sshll.u32 [#allocation2], 4
      %s17 = int_to_ptr.vmem [resolvable:$true] %s16
      %22 = dma.hbm_to_vmem [thread:$0]  %s0, 256, %s17, [#allocation3], 128, 128, 8
    $region5: #{tpu_custom_call.1} parent=1 // pred_fallthru
      _
    // Predicated region
    $region6: #{tpu_custom_call.1} parent=1 // pred_check
      _
    $region7: #{tpu_custom_call.1} parent=1 // pred_check_branch
      %24 = sbr.rel (0) target = $region9
    $region8: #{tpu_custom_call.1} parent=1 // pred_region
      %s26 = ssub.s32 512, 512
      %27 = vsyncadd [#allocation6], %s26
      %s28 = sshll.u32 [#allocation5], 4
      %s29 = int_to_ptr.vmem [resolvable:$true] %s28
      %34 = dma.hbm_to_vmem [thread:$0]  %s1, 512, %s29, [#allocation6], 128, 128, 8
    $region9: #{tpu_custom_call.1} parent=1 // pred_fallthru
      _
    // Predicated region
    $region10: #{tpu_custom_call.1} parent=1 // pred_check
      _
    $region11: #{tpu_custom_call.1} parent=1 // pred_check_branch
      %36 = sbr.rel (0) target = $region13
    $region12: #{tpu_custom_call.1} parent=1 // pred_region
      _
    $region13: #{tpu_custom_call.1} parent=1 // pred_fallthru
      _
    // Predicated region
    $region14: #{tpu_custom_call.1} parent=1 // pred_check
      _
    $region15: #{tpu_custom_call.1} parent=1 // pred_check_branch
      %38 = sbr.rel (0) target = $region17
    $region16: #{tpu_custom_call.1} parent=1 // pred_region
      %39 = dma.done [#allocation3], 256
    $region17: #{tpu_custom_call.1} parent=1 // pred_fallthru
      _
    // Predicated region
    $region18: #{tpu_custom_call.1} parent=1 // pred_check
      _
    $region19: #{tpu_custom_call.1} parent=1 // pred_check_branch
      %41 = sbr.rel (0) target = $region21
    $region20: #{tpu_custom_call.1} parent=1 // pred_region
      %42 = dma.done [#allocation6], 512
    $region21: #{tpu_custom_call.1} parent=1 // pred_fallthru
      _
    %v43 = vld [vmem:[#allocation2] sm:$0xff]
    %v44 = vld [vmem:[#allocation2 + $0x8] sm:$0xff]
    %v45 = vld [vmem:[#allocation5] sm:$0xff]
    %v46 = vld [vmem:[#allocation5 + $0x8] sm:$0xff]
    %v47 = vld [vmem:[#allocation5 + $0x10] sm:$0xff]
    %v48 = vld [vmem:[#allocation5 + $0x18] sm:$0xff]
    %v49 = vld [vmem:[%s2] sm:$0x1]
    %v51 = vlaneseq
    %v52 = vshrl.u32 %v51, 7
    %v53 = vsub.s32 0, %v52
    %v54 = vrot.slane %v49, %v53
    %vm56 = vcmask 261120
    %v58 = vsel %vm56, %v43, 0
    %v61 = vsel %vm56, %v44, 0
    %63 = vmatprep.subr.mxu0 0.0
    %64 = vmatpush1.msra.mxu0 %v45
    %65 = vmatprep.subr.mxu0 0.0
    %66 = vmatpush1.msra.mxu0 %v46
    %67 = vmatprep.subr.mxu0 0.0
    %68 = vmatpush1.msra.mxu0 %v47
    %69 = vmatprep.subr.mxu0 0.0
    %70 = vmatpush1.msra.mxu0 %v48
    %71 = vmatprep.subr.mxu0 0.0
    %72 = vmatpush1.msra.mxu0 0.0
    %73 = vmatprep.subr.mxu0 0.0
    %74 = vmatpush1.msra.mxu0 0.0
    %75 = vmatprep.subr.mxu0 0.0
    %76 = vmatpush1.msra.mxu0 0.0
    %77 = vmatprep.subr.mxu0 0.0
    %78 = vmatpush1.msra.mxu0 0.0
    %79 = vmatprep.subr.mxu0 0.0
    %80 = vmatpush1.msra.mxu0 0.0
    %81 = vmatprep.subr.mxu0 0.0
    %82 = vmatpush1.msra.mxu0 0.0
    %83 = vmatprep.subr.mxu0 0.0
    %84 = vmatpush1.msra.mxu0 0.0
    %85 = vmatprep.subr.mxu0 0.0
    %86 = vmatpush1.msra.mxu0 0.0
    %87 = vmatprep.subr.mxu0 0.0
    %88 = vmatpush1.msra.mxu0 0.0
    %89 = vmatprep.subr.mxu0 0.0
    %90 = vmatpush1.msra.mxu0 0.0
    %91 = vmatprep.subr.mxu0 0.0
    %92 = vmatpush1.msra.mxu0 0.0
    %93 = vmatprep.subr.mxu0 0.0
    %94 = vmatpush1.msra.mxu0 0.0
    %95 = vmatprep.subr.mxu0 0.0
    %96 = vmatpush1.msra.mxu0 0.0
    %97 = vmatprep.subr.mxu0 0.0
    %98 = vmatpush1.msra.mxu0 0.0
    %99 = vmatprep.subr.mxu0 0.0
    %100 = vmatpush1.msra.mxu0 0.0
    %101 = vmatprep.subr.mxu0 0.0
    %102 = vmatpush1.msra.mxu0 0.0
    %103 = vmatprep.subr.mxu0 0.0
    %104 = vmatpush1.msra.mxu0 0.0
    %105 = vmatprep.subr.mxu0 0.0
    %106 = vmatpush1.msra.mxu0 0.0
    %107 = vmatprep.subr.mxu0 0.0
    %108 = vmatpush1.msra.mxu0 0.0
    %109 = vmatprep.subr.mxu0 0.0
    %110 = vmatpush1.msra.mxu0 0.0
    %111 = vmatprep.subr.mxu0 0.0
    %112 = vmatpush1.msra.mxu0 0.0
    %113 = vmatprep.subr.mxu0 0.0
    %114 = vmatpush1.msra.mxu0 0.0
    %115 = vmatprep.subr.mxu0 0.0
    %116 = vmatpush1.msra.mxu0 0.0
    %117 = vmatprep.subr.mxu0 0.0
    %118 = vmatpush1.msra.mxu0 0.0
    %119 = vmatprep.subr.mxu0 0.0
    %120 = vmatpush1.msra.mxu0 0.0
    %121 = vmatprep.subr.mxu0 0.0
    %122 = vmatpush1.msra.mxu0 0.0
    %123 = vmatprep.subr.mxu0 0.0
    %124 = vmatpush1.msra.mxu0 0.0
    %125 = vmatprep.subr.mxu0 0.0
    %126 = vmatpush1.msra.mxu0 0.0
    %127 = vmatprep.mubr.f32.mxu0 0.0
    %128 = vmatmul.mubr.f32.gmra.mrb[0].mxu0 %v58
    %v129 = vpop.f32.mrb[0].mxu0
    %v130 = vadd.f32 %v54, %v129
    %v131 = vpop.f32.mrb[0].mxu0
    %132 = vmatprep.mubr.f32.mxu0 0.0
    %133 = vmatmul.mubr.f32.gmra.mrb[0].mxu0 %v61
    %v134 = vpop.f32.mrb[0].mxu0
    %v135 = vadd.f32 %v54, %v134
    %v136 = vpop.f32.mrb[0].mxu0
    %137 = vdwg.mxu0
    %v138 = vlaneseq
    %v139 = vand.u32 %v138, 127
    %vm140 = vcmp.lt.s32.totalorder %v139, 16
    %v141 = vmax.f32 %v130, 0.0
    %v142 = vmax.f32 %v135, 0.0
    %vm143 = vcmp.ne.f32.partialorder %v130, %v130
    %vm144 = vcmp.ne.f32.partialorder %v135, %v135
    %v145 = vadd.f32 %v130, 0.0
    %v146 = vadd.f32 %v135, 0.0
    %v147 = vand.u32 2147483647, %v130
    %v148 = vand.u32 2147483647, %v135
    %v149 = vsub.f32 0.0, %v147
    %v150 = vsub.f32 0.0, %v148
    %v151 = vmul.f32 %v149, 1.442695
    %v152 = vpow.pop %v151
    %v153 = vmul.f32 %v150, 1.442695
    %v154 = vpow.pop %v153
    %v155 = vadd.f32 %v152, 1.0
    %v156 = vlog2.pop %v155
    %v157 = vmul.f32 %v156, 0.6931472
    %v158 = vmul.f32 -0.5, %v152
    %v159 = vadd.f32 %v158, 1.0
    %v160 = vmul.f32 %v159, %v152
    %v161 = vand.u32 2147483647, %v152
    %vm162 = vcmp.lt.f32.partialorder %v161, 0.0004427343
    %v163 = vsel %vm162, %v160, %v157
    %v164 = vadd.f32 %v154, 1.0
    %v165 = vlog2.pop %v164
    %v166 = vmul.f32 %v165, 0.6931472
    %v167 = vmul.f32 -0.5, %v154
    %v168 = vadd.f32 %v167, 1.0
    %v169 = vmul.f32 %v168, %v154
    %v170 = vand.u32 2147483647, %v154
    %vm171 = vcmp.lt.f32.partialorder %v170, 0.0004427343
    %v172 = vsel %vm171, %v169, %v166
    %v173 = vadd.f32 %v141, %v163
    %v174 = vadd.f32 %v142, %v172
    %v175 = vsel %vm143, %v145, %v173
    %v176 = vsel %vm144, %v146, %v174
    %v177 = vsel %vm140, %v130, %v175
    %v178 = vsel %vm140, %v135, %v176
    %v179 = vadd.f32 %v177, 1e-08
    %v180 = vadd.f32 %v178, 1e-08
    %181 = vst [vmem:[#allocation7] sm:$0xff] %v179
    %182 = vst [vmem:[#allocation7 + $0x8] sm:$0xff] %v180
    // Predicated region
    $region22: #{tpu_custom_call.1} parent=1 // pred_check
      _
    $region23: #{tpu_custom_call.1} parent=1 // pred_check_branch
      %184 = sbr.rel (0) target = $region25
    $region24: #{tpu_custom_call.1} parent=1 // pred_region
      %s186 = ssub.s32 256, 256
      %187 = vsyncadd [#allocation4], %s186
      %s188 = sshll.u32 [#allocation7], 4
      %s189 = int_to_ptr.vmem [resolvable:$true] %s188
      %194 = dma.vmem_to_hbm [thread:$0]  %s189, 256, %s3, [#allocation4], 128, 128, 8
    $region25: #{tpu_custom_call.1} parent=1 // pred_fallthru
      _
    // Predicated region
    $region26: #{tpu_custom_call.1} parent=1 // pred_check
      _
    $region27: #{tpu_custom_call.1} parent=1 // pred_check_branch
      %196 = sbr.rel (0) target = $region29
    $region28: #{tpu_custom_call.1} parent=1 // pred_region
      %197 = dma.done [#allocation4], 256
    $region29: #{tpu_custom_call.1} parent=1 // pred_fallthru
      _
    %198 = vsyncpa [#allocation3], 1
    %199 = vsyncpa [#allocation6], 1
    %200 = vsyncpa [#allocation4], 1

</llo_original>
